<compile_context>
chip_gen: v5e
topology: v5e:2x2
jax: 0.10.0
libtpu: 0.0.40
codegen_flags: <defaults>
</compile_context>

<pallas_src>
import jax
import jax.numpy as jnp
from jax.experimental import pallas as pl
from jax.experimental.pallas import tpu as pltpu


# --------------------------------------------------------------------------- #
# Kernel
# --------------------------------------------------------------------------- #
def _meta_learner_kernel(task_ref, sup_ref, qry_ref,
                         w1_ref, b1_ref, w23_ref, b23_ref, w4_ref, b4_ref,
                         out_sup_ref, out_qry_ref):
    bf16 = jnp.bfloat16
    f32 = jnp.float32

    # task_data arrives as f32; cast to bf16 on the VPU (free here).
    x = task_ref[...].astype(bf16)

    # task_encoder: Linear(512,256) -> ReLU
    h1 = jnp.dot(x, w1_ref[...], preferred_element_type=f32) + b1_ref[...]
    h1 = jnp.maximum(h1, 0.0)

    # Fused (task_encoder Linear(256,128)) o (adaptation Linear(128,256)):
    # W23 = W2 @ W3 (f32 product host-side, bf16 cast), b23 = b2 @ W3 + b3.
    h2 = jnp.dot(h1.astype(bf16), w23_ref[...],
                 preferred_element_type=f32) + b23_ref[...]
    h2 = jnp.maximum(h2, 0.0)

    # adaptation_network: Linear(256,512)
    adapt = jnp.dot(h2.astype(bf16), w4_ref[...],
                    preferred_element_type=f32) + b4_ref[...]

    # _adapt_data: broadcast add; computed once, stored to both lane-dense
    # (TM, 512) outputs (unmasked full-width stores).
    out_sup_ref[...] = (sup_ref[...].astype(f32) + adapt).astype(out_sup_ref.dtype)
    out_qry_ref[...] = (qry_ref[...].astype(f32) + adapt).astype(out_qry_ref.dtype)


# --------------------------------------------------------------------------- #
# Helpers
# --------------------------------------------------------------------------- #
def _device_kind() -> str:
    try:
        return jax.devices()[0].device_kind.lower()
    except Exception:
        return ""


def _is_v7() -> bool:
    return "v7" in _device_kind()


def _choose_tm(B: int, target: int) -> int:
    """Pick the batch tile.

    Prefer (in order): the full batch if it is small; the target if it divides
    B; the largest divisor of B in [target//2, target] that is a multiple of 8
    (so no pad/slice HBM passes are needed); otherwise fall back to `target`
    and pad.
    """
    if B <= target:
        return B
    if B % target == 0:
        return target
    lo = max(8, target // 2)
    for t in range(target, lo - 1, -1):
        if t % 8 == 0 and B % t == 0:
            return t
    return target  # caller will pad


# --------------------------------------------------------------------------- #
# Wrapper
# --------------------------------------------------------------------------- #
def meta_learner_forward(task_data, support_set, query_set, params, *,
                         tm=None, donate_inputs=False):
    """MetaLearner forward as one Pallas kernel, tiled over the batch.

    Set donate_inputs=True only if support_set / query_set were actually
    donated to the enclosing jit; it aliases the outputs onto them.
    """
    (w1, b1, w2, b2, w3, b3, w4, b4) = params
    B, d_in = task_data.shape
    d_out = w4.shape[1]
    f32 = jnp.float32

    # Host-side weight prep: fuse the two middle Linears (exact: no activation
    # between them), then cast matmul operands to bf16.  Biases stay f32 and
    # are reshaped to lane-dense (1, N) rows.
    w23 = jnp.dot(w2.astype(f32), w3.astype(f32))
    b23 = jnp.dot(b2.astype(f32), w3.astype(f32)) + b3.astype(f32)
    w1b = w1.astype(jnp.bfloat16)
    w23b = w23.astype(jnp.bfloat16)
    w4b = w4.astype(jnp.bfloat16)
    b1r = b1.reshape(1, -1).astype(f32)
    b23r = b23.reshape(1, -1).astype(f32)
    b4r = b4.reshape(1, -1).astype(f32)

    # Batch tile selection (bigger tiles -> better HBM pipeline efficiency).
    if tm is None:
        target = 1024 if _is_v7() else 512
        tm = _choose_tm(B, target)
    n_tiles = -(-B // tm)                  # cdiv
    B_pad = n_tiles * tm
    needs_pad = B_pad != B
    if needs_pad:
        pad = ((0, B_pad - B), (0, 0))
        task_data = jnp.pad(task_data, pad)
        support_set = jnp.pad(support_set, pad)
        query_set = jnp.pad(query_set, pad)

    data_spec = lambda width: pl.BlockSpec((tm, width), lambda i: (i, 0))
    const_spec = lambda arr: pl.BlockSpec(arr.shape, lambda i: (0, 0))  # resident

    in_specs = [
        data_spec(d_in),                   # task_data (f32, cast in-kernel)
        data_spec(d_out),                  # support_set
        data_spec(d_out),                  # query_set
        const_spec(w1b), const_spec(b1r),
        const_spec(w23b), const_spec(b23r),
        const_spec(w4b), const_spec(b4r),
    ]
    out_specs = (data_spec(d_out), data_spec(d_out))
    out_shapes = (
        jax.ShapeDtypeStruct((B_pad, d_out), support_set.dtype),  # adapted_support
        jax.ShapeDtypeStruct((B_pad, d_out), query_set.dtype),    # adapted_query
    )

    # Cost estimate (advisory).
    flops = 2 * B_pad * (512 * 256 + 256 * 256 + 256 * 512)
    weight_bytes = int(sum(int(a.size) * a.dtype.itemsize
                           for a in (w1b, w23b, w4b, b1r, b23r, b4r)))
    data_bytes = int(B_pad * d_in * 4 + 4 * B_pad * d_out * 4)  # task + sup/qry in + 2 out
    cost = pl.CostEstimate(flops=int(flops), transcendentals=0,
                           bytes_accessed=weight_bytes + data_bytes)

    # VMEM budget: double-buffered data tiles + (double-buffered) resident
    # weights.  Only raise the scoped limit when we would exceed the smallest
    # default (v5e: 16 MiB).
    bytes_per_row = (d_in + 4 * d_out) * 4
    vmem_needed = 2 * tm * bytes_per_row + 2 * weight_bytes
    vmem_limit = None
    if vmem_needed > (14 << 20):
        vmem_limit = min(int(vmem_needed * 1.25), 48 << 20)

    # Batch axis semantics: CORE_PARALLEL actually splits the grid across the
    # two TensorCores on v7x; plain "parallel" elsewhere.
    dim_sem = (pltpu.CORE_PARALLEL,) if _is_v7() else ("parallel",)

    # Alias outputs onto support/query only when the caller really donated
    # them and no padded temporaries were created.
    io_aliases = {1: 0, 2: 1} if (donate_inputs and not needs_pad) else {}

    out_sup, out_qry = pl.pallas_call(
        _meta_learner_kernel,
        out_shape=out_shapes,
        grid=(n_tiles,),
        in_specs=in_specs,
        out_specs=out_specs,
        input_output_aliases=io_aliases,
        cost_estimate=cost,
        compiler_params=pltpu.CompilerParams(
            dimension_semantics=dim_sem,
            vmem_limit_bytes=vmem_limit),
    )(task_data, support_set, query_set,
      w1b, b1r, w23b, b23r, w4b, b4r)

    if needs_pad:
        out_sup, out_qry = out_sup[:B], out_qry[:B]
    return out_sup, out_qry


# --------------------------------------------------------------------------- #
# Parameter init + pure-JAX reference
# --------------------------------------------------------------------------- #
def init_params(key):
    """Deterministic parameter init (uniform +-1/sqrt(fan_in), like nn.Linear)."""
    shapes = [
        (512, 256), (256,),   # task_encoder.0
        (256, 128), (128,),   # task_encoder.2
        (128, 256), (256,),   # adaptation_network.0
        (256, 512), (512,),   # adaptation_network.2
    ]
    fan_ins = [512, 512, 256, 256, 128, 128, 256, 256]
    keys = jax.random.split(key, len(shapes))
    params = []
    for k, shp, fin in zip(keys, shapes, fan_ins):
        bound = 1.0 / jnp.sqrt(jnp.float32(fin))
        params.append(jax.random.uniform(k, shp, jnp.float32, -bound, bound))
    return tuple(params)


def _reference_forward(task_data, support_set, query_set, params):
    """Pure-JAX reference, unfused, same bf16-matmul / f32-accumulate recipe."""
    (w1, b1, w2, b2, w3, b3, w4, b4) = params
    bf16 = jnp.bfloat16

    def lin(x, w, b):
        return jnp.dot(x.astype(bf16), w.astype(bf16),
                       preferred_element_type=jnp.float32) + b

    h1 = jnp.maximum(lin(task_data, w1, b1), 0.0)
    enc = lin(h1, w2, b2)
    h2 = jnp.maximum(lin(enc, w3, b3), 0.0)
    adapt = lin(h2, w4, b4)
    return support_set + adapt, query_set + adapt


# --------------------------------------------------------------------------- #
# Self-test
# --------------------------------------------------------------------------- #
if __name__ == "__main__":
    key = jax.random.PRNGKey(0)
    k_params, k_data = jax.random.split(key)
    params = init_params(k_params)

    def make_inputs(seed, B):
        kt, ks, kq = jax.random.split(jax.random.fold_in(k_data, seed), 3)
        return (jax.random.normal(kt, (B, 512), jnp.float32),
                jax.random.normal(ks, (B, 512), jnp.float32),
                jax.random.normal(kq, (B, 512), jnp.float32))

    # B=8   : single full-array block (small-batch path)
    # B=640 : divisor tile (tm=320, 2 grid steps, no padding)
    # B=520 : padding fallback (tm=512, padded to 1024)
    for seed, B in [(0, 8), (1, 640), (2, 520)]:
        task, sup, qry = make_inputs(seed, B)
        out_sup, out_qry = meta_learner_forward(task, sup, qry, params)
        jax.block_until_ready((out_sup, out_qry))

        ref_sup, ref_qry = _reference_forward(task, sup, qry, params)
        assert out_sup.shape == (B, 512) and out_qry.shape == (B, 512)
        assert jnp.allclose(out_sup, ref_sup, atol=2e-2, rtol=2e-2), f"support mismatch B={B}"
        assert jnp.allclose(out_qry, ref_qry, atol=2e-2, rtol=2e-2), f"query mismatch B={B}"

    # TODO(synk): the module's Adam optimizer / meta-training step is training
    # machinery, not part of the forward pass, and is not implemented here.
    print("KERNEL_OK")
</pallas_src>

<mosaic_0001>
module attributes {stable_mosaic.version = 11 : i64} {
  func.func @_meta_learner_kernel(%arg0: i32, %arg1: memref<8x512xf32, #tpu.memory_space<vmem>>, %arg2: memref<8x512xf32, #tpu.memory_space<vmem>>, %arg3: memref<8x512xf32, #tpu.memory_space<vmem>>, %arg4: memref<512x256xbf16, #tpu.memory_space<vmem>>, %arg5: memref<1x256xf32, #tpu.memory_space<vmem>>, %arg6: memref<256x256xbf16, #tpu.memory_space<vmem>>, %arg7: memref<1x256xf32, #tpu.memory_space<vmem>>, %arg8: memref<256x512xbf16, #tpu.memory_space<vmem>>, %arg9: memref<1x512xf32, #tpu.memory_space<vmem>>, %arg10: memref<8x512xf32, #tpu.memory_space<vmem>>, %arg11: memref<8x512xf32, #tpu.memory_space<vmem>>) attributes {dimension_semantics = [#tpu.dimension_semantics<parallel>], iteration_bounds = array<i64: 1>, scalar_prefetch = 0 : i64, scratch_operands = 0 : i64, tpu.core_type = #tpu.core_type<tc>, window_params = [{transform_indices = @transform_0, window_bounds = array<i64: 8, 512>}, {transform_indices = @transform_1, window_bounds = array<i64: 8, 512>}, {transform_indices = @transform_2, window_bounds = array<i64: 8, 512>}, {pipeline_mode = #tpu.pipeline_mode<synchronous>, transform_indices = @transform_3, window_bounds = array<i64: 512, 256>}, {pipeline_mode = #tpu.pipeline_mode<synchronous>, transform_indices = @transform_4, window_bounds = array<i64: 1, 256>}, {pipeline_mode = #tpu.pipeline_mode<synchronous>, transform_indices = @transform_5, window_bounds = array<i64: 256, 256>}, {pipeline_mode = #tpu.pipeline_mode<synchronous>, transform_indices = @transform_6, window_bounds = array<i64: 1, 256>}, {pipeline_mode = #tpu.pipeline_mode<synchronous>, transform_indices = @transform_7, window_bounds = array<i64: 256, 512>}, {pipeline_mode = #tpu.pipeline_mode<synchronous>, transform_indices = @transform_8, window_bounds = array<i64: 1, 512>}, {transform_indices = @transform_9, window_bounds = array<i64: 8, 512>}, {transform_indices = @transform_10, window_bounds = array<i64: 8, 512>}]} {
    %c0 = arith.constant 0 : index
    %c0_0 = arith.constant 0 : index
    %0 = vector.load %arg1[%c0, %c0_0] : memref<8x512xf32, #tpu.memory_space<vmem>>, vector<8x512xf32>
    %1 = arith.truncf %0 : vector<8x512xf32> to vector<8x512xbf16>
    %c0_1 = arith.constant 0 : index
    %c0_2 = arith.constant 0 : index
    %2 = vector.load %arg4[%c0_1, %c0_2] : memref<512x256xbf16, #tpu.memory_space<vmem>>, vector<512x256xbf16>
    %cst = arith.constant dense<0.000000e+00> : vector<8x256xf32>
    %3 = tpu.matmul %1, %2, %cst {dimension_numbers = #tpu.dot_dimension_numbers<[1], [0], [0], [1], [0, 0, 1, 1], [], []>} : vector<8x512xbf16>, vector<512x256xbf16>, vector<8x256xf32> -> vector<8x256xf32>
    %c0_3 = arith.constant 0 : index
    %c0_4 = arith.constant 0 : index
    %4 = vector.load %arg5[%c0_3, %c0_4] : memref<1x256xf32, #tpu.memory_space<vmem>>, vector<1x256xf32>
    %5 = vector.broadcast %4 : vector<1x256xf32> to vector<8x256xf32>
    %6 = arith.addf %3, %5 : vector<8x256xf32>
    %cst_5 = arith.constant 0.000000e+00 : f32
    %7 = vector.broadcast %cst_5 : f32 to vector<8x256xf32>
    %8 = arith.maximumf %6, %7 : vector<8x256xf32>
    %9 = arith.truncf %8 : vector<8x256xf32> to vector<8x256xbf16>
    %c0_6 = arith.constant 0 : index
    %c0_7 = arith.constant 0 : index
    %10 = vector.load %arg6[%c0_6, %c0_7] : memref<256x256xbf16, #tpu.memory_space<vmem>>, vector<256x256xbf16>
    %cst_8 = arith.constant dense<0.000000e+00> : vector<8x256xf32>
    %11 = tpu.matmul %9, %10, %cst_8 {dimension_numbers = #tpu.dot_dimension_numbers<[1], [0], [0], [1], [0, 0, 1, 1], [], []>} : vector<8x256xbf16>, vector<256x256xbf16>, vector<8x256xf32> -> vector<8x256xf32>
    %c0_9 = arith.constant 0 : index
    %c0_10 = arith.constant 0 : index
    %12 = vector.load %arg7[%c0_9, %c0_10] : memref<1x256xf32, #tpu.memory_space<vmem>>, vector<1x256xf32>
    %13 = vector.broadcast %12 : vector<1x256xf32> to vector<8x256xf32>
    %14 = arith.addf %11, %13 : vector<8x256xf32>
    %cst_11 = arith.constant 0.000000e+00 : f32
    %15 = vector.broadcast %cst_11 : f32 to vector<8x256xf32>
    %16 = arith.maximumf %14, %15 : vector<8x256xf32>
    %17 = arith.truncf %16 : vector<8x256xf32> to vector<8x256xbf16>
    %c0_12 = arith.constant 0 : index
    %c0_13 = arith.constant 0 : index
    %18 = vector.load %arg8[%c0_12, %c0_13] : memref<256x512xbf16, #tpu.memory_space<vmem>>, vector<256x512xbf16>
    %cst_14 = arith.constant dense<0.000000e+00> : vector<8x512xf32>
    %19 = tpu.matmul %17, %18, %cst_14 {dimension_numbers = #tpu.dot_dimension_numbers<[1], [0], [0], [1], [0, 0, 1, 1], [], []>} : vector<8x256xbf16>, vector<256x512xbf16>, vector<8x512xf32> -> vector<8x512xf32>
    %c0_15 = arith.constant 0 : index
    %c0_16 = arith.constant 0 : index
    %20 = vector.load %arg9[%c0_15, %c0_16] : memref<1x512xf32, #tpu.memory_space<vmem>>, vector<1x512xf32>
    %21 = vector.broadcast %20 : vector<1x512xf32> to vector<8x512xf32>
    %22 = arith.addf %19, %21 : vector<8x512xf32>
    %c0_17 = arith.constant 0 : index
    %c0_18 = arith.constant 0 : index
    %23 = vector.load %arg2[%c0_17, %c0_18] : memref<8x512xf32, #tpu.memory_space<vmem>>, vector<8x512xf32>
    %24 = arith.addf %23, %22 : vector<8x512xf32>
    %c0_19 = arith.constant 0 : index
    %c0_20 = arith.constant 0 : index
    %25 = vector.load %arg10[%c0_19, %c0_20] : memref<8x512xf32, #tpu.memory_space<vmem>>, vector<8x512xf32>
    tpu.vector_store %arg10[%c0_19, %c0_20], %24 {strides = array<i32>} : memref<8x512xf32, #tpu.memory_space<vmem>>, vector<8x512xf32>,
    %c0_21 = arith.constant 0 : index
    %c0_22 = arith.constant 0 : index
    %26 = vector.load %arg3[%c0_21, %c0_22] : memref<8x512xf32, #tpu.memory_space<vmem>>, vector<8x512xf32>
    %27 = arith.addf %26, %22 : vector<8x512xf32>
    %c0_23 = arith.constant 0 : index
    %c0_24 = arith.constant 0 : index
    %28 = vector.load %arg11[%c0_23, %c0_24] : memref<8x512xf32, #tpu.memory_space<vmem>>, vector<8x512xf32>
    tpu.vector_store %arg11[%c0_23, %c0_24], %27 {strides = array<i32>} : memref<8x512xf32, #tpu.memory_space<vmem>>, vector<8x512xf32>,
    return
  }
  func.func @transform_0(%arg0: i32) -> (i32, i32) {
    %c0_i32 = arith.constant 0 : i32
    %c0_i32_0 = arith.constant 0 : i32
    return %arg0, %c0_i32 : i32, i32
  }
  func.func @transform_1(%arg0: i32) -> (i32, i32) {
    %c0_i32 = arith.constant 0 : i32
    %c0_i32_0 = arith.constant 0 : i32
    return %arg0, %c0_i32 : i32, i32
  }
  func.func @transform_2(%arg0: i32) -> (i32, i32) {
    %c0_i32 = arith.constant 0 : i32
    %c0_i32_0 = arith.constant 0 : i32
    return %arg0, %c0_i32 : i32, i32
  }
  func.func @transform_3(%arg0: i32) -> (i32, i32) {
    %c0_i32 = arith.constant 0 : i32
    %c0_i32_0 = arith.constant 0 : i32
    %c0_i32_1 = arith.constant 0 : i32
    return %c0_i32, %c0_i32_0 : i32, i32
  }
  func.func @transform_4(%arg0: i32) -> (i32, i32) {
    %c0_i32 = arith.constant 0 : i32
    %c0_i32_0 = arith.constant 0 : i32
    %c0_i32_1 = arith.constant 0 : i32
    return %c0_i32, %c0_i32_0 : i32, i32
  }
  func.func @transform_5(%arg0: i32) -> (i32, i32) {
    %c0_i32 = arith.constant 0 : i32
    %c0_i32_0 = arith.constant 0 : i32
    %c0_i32_1 = arith.constant 0 : i32
    return %c0_i32, %c0_i32_0 : i32, i32
  }
  func.func @transform_6(%arg0: i32) -> (i32, i32) {
    %c0_i32 = arith.constant 0 : i32
    %c0_i32_0 = arith.constant 0 : i32
    %c0_i32_1 = arith.constant 0 : i32
    return %c0_i32, %c0_i32_0 : i32, i32
  }
  func.func @transform_7(%arg0: i32) -> (i32, i32) {
    %c0_i32 = arith.constant 0 : i32
    %c0_i32_0 = arith.constant 0 : i32
    %c0_i32_1 = arith.constant 0 : i32
    return %c0_i32, %c0_i32_0 : i32, i32
  }
  func.func @transform_8(%arg0: i32) -> (i32, i32) {
    %c0_i32 = arith.constant 0 : i32
    %c0_i32_0 = arith.constant 0 : i32
    %c0_i32_1 = arith.constant 0 : i32
    return %c0_i32, %c0_i32_0 : i32, i32
  }
  func.func @transform_9(%arg0: i32) -> (i32, i32) {
    %c0_i32 = arith.constant 0 : i32
    %c0_i32_0 = arith.constant 0 : i32
    return %arg0, %c0_i32 : i32, i32
  }
  func.func @transform_10(%arg0: i32) -> (i32, i32) {
    %c0_i32 = arith.constant 0 : i32
    %c0_i32_0 = arith.constant 0 : i32
    return %arg0, %c0_i32 : i32, i32
  }
}

</mosaic_0001>

<llo_original>
// kernel: tpu_custom_call.1
$region0: #{tpu_custom_call.1}
  #allocation0 [shape = 'u32[]', space=smem, size = 0x4, offset = 0x4, fixed_abs, tag = 'smem constant byte address 0x4 - core index']
  #allocation1 [shape = 'u32[72,128]{1,0:T(1,128)}', space=vmem, size = 0x9000, scoped, tag = 'internal scratch']
  %s0 = inlined_call_operand.hbm [shape: f32[8,512], index: 0, kind: input, shape index: {}]
  %s1 = inlined_call_operand.hbm [shape: f32[8,512], index: 1, kind: input, shape index: {}]
  %s2 = inlined_call_operand.hbm [shape: f32[8,512], index: 2, kind: input, shape index: {}]
  %s3 = inlined_call_operand.hbm [shape: bf16[512,256], index: 3, kind: input, shape index: {}]
  %s4 = inlined_call_operand.vmem [shape: f32[1,256], index: 4, kind: input, shape index: {}]
  %s5 = inlined_call_operand.hbm [shape: bf16[256,256], index: 5, kind: input, shape index: {}]
  %s6 = inlined_call_operand.hbm [shape: f32[1,256], index: 6, kind: input, shape index: {}]
  %s7 = inlined_call_operand.hbm [shape: bf16[256,512], index: 7, kind: input, shape index: {}]
  %s8 = inlined_call_operand.vmem [shape: f32[1,512], index: 8, kind: input, shape index: {}]
  %s9 = inlined_call_operand.hbm [shape: f32[8,512], index: 9, kind: output, shape index: {0}]
  %s10 = inlined_call_operand.hbm [shape: f32[8,512], index: 10, kind: output, shape index: {1}]
  %11 = xla_tuple %s9, %s10
  %s12 = sld [smem:[#allocation0]]
  $region82: #{tpu_custom_call.1} parent=0
    _
  %s14 = ssub.s32 1, %s12
  %s15 = scalar_select 0, %s14, %s12
  $region1: #{tpu_custom_call.1} parent=0
    #allocation2 [shape = 'u8[16384]{0}', space=vmem, size = 0x4000, scoped, tag = 'input window, operand 0, single buffered']
    #allocation3 [shape = 's32[1]{0}', space=sflag, size = 0x4, scoped, tag = 'scoped memory for tpu_custom_call.1']
    #allocation4 [shape = 's32[1]{0}', space=sflag, size = 0x4, scoped, tag = 'scoped memory for tpu_custom_call.1']
    #allocation5 [shape = 'u8[16384]{0}', space=vmem, size = 0x4000, scoped, tag = 'input window, operand 1, single buffered']
    #allocation6 [shape = 's32[1]{0}', space=sflag, size = 0x4, scoped, tag = 'scoped memory for tpu_custom_call.1']
    #allocation7 [shape = 'u8[16384]{0}', space=vmem, size = 0x4000, scoped, tag = 'input window, operand 2, single buffered']
    #allocation8 [shape = 'u8[262144]{0}', space=vmem, size = 0x40000, scoped, tag = 'input window, operand 3, single buffered']
    #allocation9 [shape = 's32[1]{0}', space=sflag, size = 0x4, scoped, tag = 'scoped memory for tpu_custom_call.1']
    #allocation10 [shape = 'u8[131072]{0}', space=vmem, size = 0x20000, scoped, tag = 'input window, operand 5, single buffered']
    #allocation11 [shape = 'u8[1024]{0}', space=vmem, size = 0x400, scoped, tag = 'input window, operand 6, single buffered']
    #allocation12 [shape = 's32[1]{0}', space=sflag, size = 0x4, scoped, tag = 'scoped memory for tpu_custom_call.1']
    #allocation13 [shape = 'u8[262144]{0}', space=vmem, size = 0x40000, scoped, tag = 'input window, operand 7, single buffered']
    #allocation14 [shape = 'u8[16384]{0}', space=vmem, size = 0x4000, scoped, tag = 'output window, operand 0, single buffered']
    #allocation15 [shape = 'u8[16384]{0}', space=vmem, size = 0x4000, scoped, tag = 'output window, operand 1, single buffered']
    #allocation16 [shape = 's32[1]{0}', space=sflag, size = 0x4, scoped, tag = 'scoped memory for tpu_custom_call.1']
    %16 = vsyncpa [#allocation3], 0
    %17 = vsyncpa [#allocation6], 0
    %18 = vsyncpa [#allocation9], 0
    %19 = vsyncpa [#allocation12], 0
    %20 = vsyncpa [#allocation4], 0
    %21 = vsyncpa [#allocation16], 0
    // Predicated region
    $region2: #{tpu_custom_call.1} parent=1 // pred_check
      _
    $region3: #{tpu_custom_call.1} parent=1 // pred_check_branch
      %23 = sbr.rel (0) target = $region5
    $region4: #{tpu_custom_call.1} parent=1 // pred_region
      %25 = vsyncadd [#allocation3], 0
      %s27 = sshll.u32 %s0, 4
      %s28 = int_to_ptr.hbm [resolvable:$true] %s27
      %s29 = sshll.u32 [#allocation2], 4
      %s30 = int_to_ptr.vmem [resolvable:$true] %s29
      %32 = dma.hbm_to_vmem [thread:$0]  %s28, 512, %s30, [#allocation3]
    $region5: #{tpu_custom_call.1} parent=1 // pred_fallthru
      _
    // Predicated region
    $region6: #{tpu_custom_call.1} parent=1 // pred_check
      _
    $region7: #{tpu_custom_call.1} parent=1 // pred_check_branch
      %34 = sbr.rel (0) target = $region9
    $region8: #{tpu_custom_call.1} parent=1 // pred_region
      %36 = vsyncadd [#allocation6], 0
      %s38 = sshll.u32 %s1, 4
      %s39 = int_to_ptr.hbm [resolvable:$true] %s38
      %s40 = sshll.u32 [#allocation5], 4
      %s41 = int_to_ptr.vmem [resolvable:$true] %s40
      %43 = dma.hbm_to_vmem [thread:$0]  %s39, 512, %s41, [#allocation6]
    $region9: #{tpu_custom_call.1} parent=1 // pred_fallthru
      _
    // Predicated region
    $region10: #{tpu_custom_call.1} parent=1 // pred_check
      _
    $region11: #{tpu_custom_call.1} parent=1 // pred_check_branch
      %45 = sbr.rel (0) target = $region13
    $region12: #{tpu_custom_call.1} parent=1 // pred_region
      %47 = vsyncadd [#allocation6], 0
      %s49 = sshll.u32 %s2, 4
      %s50 = int_to_ptr.hbm [resolvable:$true] %s49
      %s51 = sshll.u32 [#allocation7], 4
      %s52 = int_to_ptr.vmem [resolvable:$true] %s51
      %54 = dma.hbm_to_vmem [thread:$0]  %s50, 512, %s52, [#allocation6]
    $region13: #{tpu_custom_call.1} parent=1 // pred_fallthru
      _
    // Predicated region
    $region14: #{tpu_custom_call.1} parent=1 // pred_check
      _
    $region15: #{tpu_custom_call.1} parent=1 // pred_check_branch
      %56 = sbr.rel (0) target = $region17
    $region16: #{tpu_custom_call.1} parent=1 // pred_region
      %58 = vsyncadd [#allocation9], 0
      %s59 = sshll.u32 %s3, 4
      %s60 = int_to_ptr.hbm [resolvable:$true] %s59
      %s61 = sshll.u32 [#allocation8], 4
      %s62 = int_to_ptr.vmem [resolvable:$true] %s61
      %67 = dma.hbm_to_vmem [thread:$0]  %s60, 8192, %s62, [#allocation9], 128, 128, 8
    $region17: #{tpu_custom_call.1} parent=1 // pred_fallthru
      _
    // Predicated region
    $region18: #{tpu_custom_call.1} parent=1 // pred_check
      _
    $region19: #{tpu_custom_call.1} parent=1 // pred_check_branch
      %69 = sbr.rel (0) target = $region21
    $region20: #{tpu_custom_call.1} parent=1 // pred_region
      _
    $region21: #{tpu_custom_call.1} parent=1 // pred_fallthru
      _
    // Predicated region
    $region22: #{tpu_custom_call.1} parent=1 // pred_check
      _
    $region23: #{tpu_custom_call.1} parent=1 // pred_check_branch
      %71 = sbr.rel (0) target = $region25
    $region24: #{tpu_custom_call.1} parent=1 // pred_region
      %73 = vsyncadd [#allocation9], 0
      %s74 = sshll.u32 %s5, 4
      %s75 = int_to_ptr.hbm [resolvable:$true] %s74
      %s76 = sshll.u32 [#allocation10], 4
      %s77 = int_to_ptr.vmem [resolvable:$true] %s76
      %82 = dma.hbm_to_vmem [thread:$0]  %s75, 4096, %s77, [#allocation9], 128, 128, 8
    $region25: #{tpu_custom_call.1} parent=1 // pred_fallthru
      _
    // Predicated region
    $region26: #{tpu_custom_call.1} parent=1 // pred_check
      _
    $region27: #{tpu_custom_call.1} parent=1 // pred_check_branch
      %84 = sbr.rel (0) target = $region29
    $region28: #{tpu_custom_call.1} parent=1 // pred_region
      %86 = vsyncadd [#allocation12], 0
      %s88 = sshll.u32 %s6, 4
      %s89 = int_to_ptr.hbm [resolvable:$true] %s88
      %s90 = sshll.u32 [#allocation11], 4
      %s91 = int_to_ptr.vmem [resolvable:$true] %s90
      %93 = dma.hbm_to_vmem [thread:$0]  %s89, 32, %s91, [#allocation12]
    $region29: #{tpu_custom_call.1} parent=1 // pred_fallthru
      _
    // Predicated region
    $region30: #{tpu_custom_call.1} parent=1 // pred_check
      _
    $region31: #{tpu_custom_call.1} parent=1 // pred_check_branch
      %95 = sbr.rel (0) target = $region33
    $region32: #{tpu_custom_call.1} parent=1 // pred_region
      %97 = vsyncadd [#allocation12], 0
      %s98 = sshll.u32 %s7, 4
      %s99 = int_to_ptr.hbm [resolvable:$true] %s98
      %s100 = sshll.u32 [#allocation13], 4
      %s101 = int_to_ptr.vmem [resolvable:$true] %s100
      %106 = dma.hbm_to_vmem [thread:$0]  %s99, 8192, %s101, [#allocation12], 256, 256, 16
    $region33: #{tpu_custom_call.1} parent=1 // pred_fallthru
      _
    // Predicated region
    $region34: #{tpu_custom_call.1} parent=1 // pred_check
      _
    $region35: #{tpu_custom_call.1} parent=1 // pred_check_branch
      %108 = sbr.rel (0) target = $region37
    $region36: #{tpu_custom_call.1} parent=1 // pred_region
      _
    $region37: #{tpu_custom_call.1} parent=1 // pred_fallthru
      _
    // Predicated region
    $region38: #{tpu_custom_call.1} parent=1 // pred_check
      _
    $region39: #{tpu_custom_call.1} parent=1 // pred_check_branch
      %110 = sbr.rel (0) target = $region41
    $region40: #{tpu_custom_call.1} parent=1 // pred_region
      %112 = dma.done [#allocation3], 512
    $region41: #{tpu_custom_call.1} parent=1 // pred_fallthru
      _
    // Predicated region
    $region42: #{tpu_custom_call.1} parent=1 // pred_check
      _
    $region43: #{tpu_custom_call.1} parent=1 // pred_check_branch
      %114 = sbr.rel (0) target = $region45
    $region44: #{tpu_custom_call.1} parent=1 // pred_region
      %116 = dma.done [#allocation6], 512
    $region45: #{tpu_custom_call.1} parent=1 // pred_fallthru
      _
    // Predicated region
    $region46: #{tpu_custom_call.1} parent=1 // pred_check
      _
    $region47: #{tpu_custom_call.1} parent=1 // pred_check_branch
      %118 = sbr.rel (0) target = $region49
    $region48: #{tpu_custom_call.1} parent=1 // pred_region
      %120 = dma.done [#allocation6], 512
    $region49: #{tpu_custom_call.1} parent=1 // pred_fallthru
      _
    // Predicated region
    $region50: #{tpu_custom_call.1} parent=1 // pred_check
      _
    $region51: #{tpu_custom_call.1} parent=1 // pred_check_branch
      %122 = sbr.rel (0) target = $region53
    $region52: #{tpu_custom_call.1} parent=1 // pred_region
      %124 = dma.done [#allocation9], 8192
    $region53: #{tpu_custom_call.1} parent=1 // pred_fallthru
      _
    // Predicated region
    $region54: #{tpu_custom_call.1} parent=1 // pred_check
      _
    $region55: #{tpu_custom_call.1} parent=1 // pred_check_branch
      %126 = sbr.rel (0) target = $region57
    $region56: #{tpu_custom_call.1} parent=1 // pred_region
      %128 = dma.done [#allocation9], 4096
    $region57: #{tpu_custom_call.1} parent=1 // pred_fallthru
      _
    // Predicated region
    $region58: #{tpu_custom_call.1} parent=1 // pred_check
      _
    $region59: #{tpu_custom_call.1} parent=1 // pred_check_branch
      %130 = sbr.rel (0) target = $region61
    $region60: #{tpu_custom_call.1} parent=1 // pred_region
      %132 = dma.done [#allocation12], 32
    $region61: #{tpu_custom_call.1} parent=1 // pred_fallthru
      _
    // Predicated region
    $region62: #{tpu_custom_call.1} parent=1 // pred_check
      _
    $region63: #{tpu_custom_call.1} parent=1 // pred_check_branch
      %134 = sbr.rel (0) target = $region65
    $region64: #{tpu_custom_call.1} parent=1 // pred_region
      %136 = dma.done [#allocation12], 8192
    $region65: #{tpu_custom_call.1} parent=1 // pred_fallthru
      _
    %v137 = vld [vmem:[#allocation2] sm:$0xff]
    %v138 = vld [vmem:[#allocation2 + $0x8] sm:$0xff]
    %v139 = vld [vmem:[#allocation2 + $0x10] sm:$0xff]
    %v140 = vld [vmem:[#allocation2 + $0x18] sm:$0xff]
    %v141 = vpack.c.bf16 %v137, %v137
    %v142 = vpack.c.bf16 %v138, %v138
    %v143 = vpack.c.bf16 %v139, %v139
    %v144 = vpack.c.bf16 %v140, %v140
    %v145 = vld [vmem:[#allocation8] sm:$0xff]
    %v146 = vld [vmem:[#allocation8 + $0x8] sm:$0xff]
    %v147 = vld [vmem:[#allocation8 + $0x10] sm:$0xff]
    %v148 = vld [vmem:[#allocation8 + $0x18] sm:$0xff]
    %v149 = vld [vmem:[#allocation8 + $0x20] sm:$0xff]
    %v150 = vld [vmem:[#allocation8 + $0x28] sm:$0xff]
    %v151 = vld [vmem:[#allocation8 + $0x30] sm:$0xff]
    %v152 = vld [vmem:[#allocation8 + $0x38] sm:$0xff]
    %v153 = vld [vmem:[#allocation8 + $0x40] sm:$0xff]
    %v154 = vld [vmem:[#allocation8 + $0x48] sm:$0xff]
    %v155 = vld [vmem:[#allocation8 + $0x50] sm:$0xff]
    %v156 = vld [vmem:[#allocation8 + $0x58] sm:$0xff]
    %v157 = vld [vmem:[#allocation8 + $0x60] sm:$0xff]
    %v158 = vld [vmem:[#allocation8 + $0x68] sm:$0xff]
    %v159 = vld [vmem:[#allocation8 + $0x70] sm:$0xff]
    %v160 = vld [vmem:[#allocation8 + $0x78] sm:$0xff]
    %v161 = vld [vmem:[#allocation8 + $0x80] sm:$0xff]
    %v162 = vld [vmem:[#allocation8 + $0x88] sm:$0xff]
    %v163 = vld [vmem:[#allocation8 + $0x90] sm:$0xff]
    %v164 = vld [vmem:[#allocation8 + $0x98] sm:$0xff]
    %v165 = vld [vmem:[#allocation8 + $0xa0] sm:$0xff]
    %v166 = vld [vmem:[#allocation8 + $0xa8] sm:$0xff]
    %v167 = vld [vmem:[#allocation8 + $0xb0] sm:$0xff]
    %v168 = vld [vmem:[#allocation8 + $0xb8] sm:$0xff]
    %v169 = vld [vmem:[#allocation8 + $0xc0] sm:$0xff]
    %v170 = vld [vmem:[#allocation8 + $0xc8] sm:$0xff]
    %v171 = vld [vmem:[#allocation8 + $0xd0] sm:$0xff]
    %v172 = vld [vmem:[#allocation8 + $0xd8] sm:$0xff]
    %v173 = vld [vmem:[#allocation8 + $0xe0] sm:$0xff]
    %v174 = vld [vmem:[#allocation8 + $0xe8] sm:$0xff]
    %v175 = vld [vmem:[#allocation8 + $0xf0] sm:$0xff]
    %v176 = vld [vmem:[#allocation8 + $0xf8] sm:$0xff]
    %v177 = vld [vmem:[#allocation8 + $0x100] sm:$0xff]
    %v178 = vld [vmem:[#allocation8 + $0x108] sm:$0xff]
    %v179 = vld [vmem:[#allocation8 + $0x110] sm:$0xff]
    %v180 = vld [vmem:[#allocation8 + $0x118] sm:$0xff]
    %v181 = vld [vmem:[#allocation8 + $0x120] sm:$0xff]
    %v182 = vld [vmem:[#allocation8 + $0x128] sm:$0xff]
    %v183 = vld [vmem:[#allocation8 + $0x130] sm:$0xff]
    %v184 = vld [vmem:[#allocation8 + $0x138] sm:$0xff]
    %v185 = vld [vmem:[#allocation8 + $0x140] sm:$0xff]
    %v186 = vld [vmem:[#allocation8 + $0x148] sm:$0xff]
    %v187 = vld [vmem:[#allocation8 + $0x150] sm:$0xff]
    %v188 = vld [vmem:[#allocation8 + $0x158] sm:$0xff]
    %v189 = vld [vmem:[#allocation8 + $0x160] sm:$0xff]
    %v190 = vld [vmem:[#allocation8 + $0x168] sm:$0xff]
    %v191 = vld [vmem:[#allocation8 + $0x170] sm:$0xff]
    %v192 = vld [vmem:[#allocation8 + $0x178] sm:$0xff]
    %v193 = vld [vmem:[#allocation8 + $0x180] sm:$0xff]
    %v194 = vld [vmem:[#allocation8 + $0x188] sm:$0xff]
    %v195 = vld [vmem:[#allocation8 + $0x190] sm:$0xff]
    %v196 = vld [vmem:[#allocation8 + $0x198] sm:$0xff]
    %v197 = vld [vmem:[#allocation8 + $0x1a0] sm:$0xff]
    %v198 = vld [vmem:[#allocation8 + $0x1a8] sm:$0xff]
    %v199 = vld [vmem:[#allocation8 + $0x1b0] sm:$0xff]
    %v200 = vld [vmem:[#allocation8 + $0x1b8] sm:$0xff]
    %v201 = vld [vmem:[#allocation8 + $0x1c0] sm:$0xff]
    %v202 = vld [vmem:[#allocation8 + $0x1c8] sm:$0xff]
    %v203 = vld [vmem:[#allocation8 + $0x1d0] sm:$0xff]
    %v204 = vld [vmem:[#allocation8 + $0x1d8] sm:$0xff]
    %v205 = vld [vmem:[#allocation8 + $0x1e0] sm:$0xff]
    %v206 = vld [vmem:[#allocation8 + $0x1e8] sm:$0xff]
    %v207 = vld [vmem:[#allocation8 + $0x1f0] sm:$0xff]
    %v208 = vld [vmem:[#allocation8 + $0x1f8] sm:$0xff]
    %v209 = vld [vmem:[%s4] sm:$0x3]
    %v211 = vperm.slane %v209, 0
    %v212 = vperm.slane %v209, 1
    %v279 = vunpack.c.l.b16 %v145
    %v280 = vunpack.c.h.b16 %v145
    %v281 = vunpack.c.l.b16 %v146
    %v282 = vunpack.c.h.b16 %v146
    %v283 = vunpack.c.l.b16 %v147
    %v284 = vunpack.c.h.b16 %v147
    %v285 = vunpack.c.l.b16 %v148
    %v286 = vunpack.c.h.b16 %v148
    %v287 = vunpack.c.l.b16 %v149
    %v288 = vunpack.c.h.b16 %v149
    %v289 = vunpack.c.l.b16 %v150
    %v290 = vunpack.c.h.b16 %v150
    %v291 = vunpack.c.l.b16 %v151
    %v292 = vunpack.c.h.b16 %v151
    %v293 = vunpack.c.l.b16 %v152
    %v294 = vunpack.c.h.b16 %v152
    %v295 = vunpack.c.l.b16 %v153
    %v296 = vunpack.c.h.b16 %v153
    %v297 = vunpack.c.l.b16 %v154
    %v298 = vunpack.c.h.b16 %v154
    %v299 = vunpack.c.l.b16 %v155
    %v300 = vunpack.c.h.b16 %v155
    %v301 = vunpack.c.l.b16 %v156
    %v302 = vunpack.c.h.b16 %v156
    %v303 = vunpack.c.l.b16 %v157
    %v304 = vunpack.c.h.b16 %v157
    %v305 = vunpack.c.l.b16 %v158
    %v306 = vunpack.c.h.b16 %v158
    %v307 = vunpack.c.l.b16 %v159
    %v308 = vunpack.c.h.b16 %v159
    %v309 = vunpack.c.l.b16 %v160
    %v310 = vunpack.c.h.b16 %v160
    %v311 = vunpack.c.l.b16 %v161
    %v312 = vunpack.c.h.b16 %v161
    %v313 = vunpack.c.l.b16 %v162
    %v314 = vunpack.c.h.b16 %v162
    %v315 = vunpack.c.l.b16 %v163
    %v316 = vunpack.c.h.b16 %v163
    %v317 = vunpack.c.l.b16 %v164
    %v318 = vunpack.c.h.b16 %v164
    %v319 = vunpack.c.l.b16 %v165
    %v320 = vunpack.c.h.b16 %v165
    %v321 = vunpack.c.l.b16 %v166
    %v322 = vunpack.c.h.b16 %v166
    %v323 = vunpack.c.l.b16 %v167
    %v324 = vunpack.c.h.b16 %v167
    %v325 = vunpack.c.l.b16 %v168
    %v326 = vunpack.c.h.b16 %v168
    %v327 = vunpack.c.l.b16 %v169
    %v328 = vunpack.c.h.b16 %v169
    %v329 = vunpack.c.l.b16 %v170
    %v330 = vunpack.c.h.b16 %v170
    %v331 = vunpack.c.l.b16 %v171
    %v332 = vunpack.c.h.b16 %v171
    %v333 = vunpack.c.l.b16 %v172
    %v334 = vunpack.c.h.b16 %v172
    %v335 = vunpack.c.l.b16 %v173
    %v336 = vunpack.c.h.b16 %v173
    %v337 = vunpack.c.l.b16 %v174
    %v338 = vunpack.c.h.b16 %v174
    %v339 = vunpack.c.l.b16 %v175
    %v340 = vunpack.c.h.b16 %v175
    %v341 = vunpack.c.l.b16 %v176
    %v342 = vunpack.c.h.b16 %v176
    %v343 = vunpack.c.l.b16 %v177
    %v344 = vunpack.c.h.b16 %v177
    %v345 = vunpack.c.l.b16 %v178
    %v346 = vunpack.c.h.b16 %v178
    %v347 = vunpack.c.l.b16 %v179
    %v348 = vunpack.c.h.b16 %v179
    %v349 = vunpack.c.l.b16 %v180
    %v350 = vunpack.c.h.b16 %v180
    %v351 = vunpack.c.l.b16 %v181
    %v352 = vunpack.c.h.b16 %v181
    %v353 = vunpack.c.l.b16 %v182
    %v354 = vunpack.c.h.b16 %v182
    %v355 = vunpack.c.l.b16 %v183
    %v356 = vunpack.c.h.b16 %v183
    %v357 = vunpack.c.l.b16 %v184
    %v358 = vunpack.c.h.b16 %v184
    %v359 = vunpack.c.l.b16 %v185
    %v360 = vunpack.c.h.b16 %v185
    %v361 = vunpack.c.l.b16 %v186
    %v362 = vunpack.c.h.b16 %v186
    %v363 = vunpack.c.l.b16 %v187
    %v364 = vunpack.c.h.b16 %v187
    %v365 = vunpack.c.l.b16 %v188
    %v366 = vunpack.c.h.b16 %v188
    %v367 = vunpack.c.l.b16 %v189
    %v368 = vunpack.c.h.b16 %v189
    %v369 = vunpack.c.l.b16 %v190
    %v370 = vunpack.c.h.b16 %v190
    %v371 = vunpack.c.l.b16 %v191
    %v372 = vunpack.c.h.b16 %v191
    %v373 = vunpack.c.l.b16 %v192
    %v374 = vunpack.c.h.b16 %v192
    %v375 = vunpack.c.l.b16 %v193
    %v376 = vunpack.c.h.b16 %v193
    %v377 = vunpack.c.l.b16 %v194
    %v378 = vunpack.c.h.b16 %v194
    %v379 = vunpack.c.l.b16 %v195
    %v380 = vunpack.c.h.b16 %v195
    %v381 = vunpack.c.l.b16 %v196
    %v382 = vunpack.c.h.b16 %v196
    %v383 = vunpack.c.l.b16 %v197
    %v384 = vunpack.c.h.b16 %v197
    %v385 = vunpack.c.l.b16 %v198
    %v386 = vunpack.c.h.b16 %v198
    %v387 = vunpack.c.l.b16 %v199
    %v388 = vunpack.c.h.b16 %v199
    %v389 = vunpack.c.l.b16 %v200
    %v390 = vunpack.c.h.b16 %v200
    %v391 = vunpack.c.l.b16 %v201
    %v392 = vunpack.c.h.b16 %v201
    %v393 = vunpack.c.l.b16 %v202
    %v394 = vunpack.c.h.b16 %v202
    %v395 = vunpack.c.l.b16 %v203
    %v396 = vunpack.c.h.b16 %v203
    %v397 = vunpack.c.l.b16 %v204
    %v398 = vunpack.c.h.b16 %v204
    %v399 = vunpack.c.l.b16 %v205
    %v400 = vunpack.c.h.b16 %v205
    %v401 = vunpack.c.l.b16 %v206
    %v402 = vunpack.c.h.b16 %v206
    %v403 = vunpack.c.l.b16 %v207
    %v404 = vunpack.c.h.b16 %v207
    %v405 = vunpack.c.l.b16 %v208
    %v406 = vunpack.c.h.b16 %v208
    %v407 = vpack.c.b16 %v281, %v279
    %v408 = vpack.c.b16 %v282, %v280
    %v409 = vpack.c.b16 %v285, %v283
    %v410 = vpack.c.b16 %v286, %v284
    %v411 = vpack.c.b16 %v289, %v287
    %v412 = vpack.c.b16 %v290, %v288
    %v413 = vpack.c.b16 %v293, %v291
    %v414 = vpack.c.b16 %v294, %v292
    %v415 = vpack.c.b16 %v297, %v295
    %v416 = vpack.c.b16 %v298, %v296
    %v417 = vpack.c.b16 %v301, %v299
    %v418 = vpack.c.b16 %v302, %v300
    %v419 = vpack.c.b16 %v305, %v303
    %v420 = vpack.c.b16 %v306, %v304
    %v421 = vpack.c.b16 %v309, %v307
    %v422 = vpack.c.b16 %v310, %v308
    %v423 = vpack.c.b16 %v313, %v311
    %v424 = vpack.c.b16 %v314, %v312
    %v425 = vpack.c.b16 %v317, %v315
    %v426 = vpack.c.b16 %v318, %v316
    %v427 = vpack.c.b16 %v321, %v319
    %v428 = vpack.c.b16 %v322, %v320
    %v429 = vpack.c.b16 %v325, %v323
    %v430 = vpack.c.b16 %v326, %v324
    %v431 = vpack.c.b16 %v329, %v327
    %v432 = vpack.c.b16 %v330, %v328
    %v433 = vpack.c.b16 %v333, %v331
    %v434 = vpack.c.b16 %v334, %v332
    %v435 = vpack.c.b16 %v337, %v335
    %v436 = vpack.c.b16 %v338, %v336
    %v437 = vpack.c.b16 %v341, %v339
    %v438 = vpack.c.b16 %v342, %v340
    %v439 = vpack.c.b16 %v345, %v343
    %v440 = vpack.c.b16 %v346, %v344
    %v441 = vpack.c.b16 %v349, %v347
    %v442 = vpack.c.b16 %v350, %v348
    %v443 = vpack.c.b16 %v353, %v351
    %v444 = vpack.c.b16 %v354, %v352
    %v445 = vpack.c.b16 %v357, %v355
    %v446 = vpack.c.b16 %v358, %v356
    %v447 = vpack.c.b16 %v361, %v359
    %v448 = vpack.c.b16 %v362, %v360
    %v449 = vpack.c.b16 %v365, %v363
    %v450 = vpack.c.b16 %v366, %v364
    %v451 = vpack.c.b16 %v369, %v367
    %v452 = vpack.c.b16 %v370, %v368
    %v453 = vpack.c.b16 %v373, %v371
    %v454 = vpack.c.b16 %v374, %v372
    %v455 = vpack.c.b16 %v377, %v375
    %v456 = vpack.c.b16 %v378, %v376
    %v457 = vpack.c.b16 %v381, %v379
    %v458 = vpack.c.b16 %v382, %v380
    %v459 = vpack.c.b16 %v385, %v383
    %v460 = vpack.c.b16 %v386, %v384
    %v461 = vpack.c.b16 %v389, %v387
    %v462 = vpack.c.b16 %v390, %v388
    %v463 = vpack.c.b16 %v393, %v391
    %v464 = vpack.c.b16 %v394, %v392
    %v465 = vpack.c.b16 %v397, %v395
    %v466 = vpack.c.b16 %v398, %v396
    %v467 = vpack.c.b16 %v401, %v399
    %v468 = vpack.c.b16 %v402, %v400
    %v469 = vpack.c.b16 %v405, %v403
    %v470 = vpack.c.b16 %v406, %v404
    %535 = vmatpush.bf16.msra.mxu0 %v421
    %536 = vmatpush.bf16.msra.mxu0 %v419
    %537 = vmatpush.bf16.msra.mxu0 %v417
    %538 = vmatpush.bf16.msra.mxu0 %v415
    %539 = vmatpush.bf16.msra.mxu0 %v413
    %540 = vmatpush.bf16.msra.mxu0 %v411
    %541 = vmatpush.bf16.msra.mxu0 %v409
    %542 = vmatpush.bf16.msra.mxu0 %v407
    %543 = vmatmul.bf16.gmra.mxu0 %v141
    %v544 = vpop.f32.mrf.mxu0
    %v545 = vadd.f32 %v211, %v544
    %v546 = vpop.f32.mrf.mxu0
    %547 = vdwg.mxu0
    %548 = vmatpush.bf16.msra.mxu0 %v437
    %549 = vmatpush.bf16.msra.mxu0 %v435
    %550 = vmatpush.bf16.msra.mxu0 %v433
    %551 = vmatpush.bf16.msra.mxu0 %v431
    %552 = vmatpush.bf16.msra.mxu0 %v429
    %553 = vmatpush.bf16.msra.mxu0 %v427
    %554 = vmatpush.bf16.msra.mxu0 %v425
    %555 = vmatpush.bf16.msra.mxu0 %v423
    %556 = vmatmul.bf16.gmra.mxu0 %v142
    %v557 = vpop.f32.mrf.mxu0
    %v558 = vadd.f32 %v545, %v557
    %v559 = vpop.f32.mrf.mxu0
    %560 = vdwg.mxu0
    %561 = vmatpush.bf16.msra.mxu0 %v453
    %562 = vmatpush.bf16.msra.mxu0 %v451
    %563 = vmatpush.bf16.msra.mxu0 %v449
    %564 = vmatpush.bf16.msra.mxu0 %v447
    %565 = vmatpush.bf16.msra.mxu0 %v445
    %566 = vmatpush.bf16.msra.mxu0 %v443
    %567 = vmatpush.bf16.msra.mxu0 %v441
    %568 = vmatpush.bf16.msra.mxu0 %v439
    %569 = vmatmul.bf16.gmra.mxu0 %v143
    %v570 = vpop.f32.mrf.mxu0
    %v571 = vadd.f32 %v558, %v570
    %v572 = vpop.f32.mrf.mxu0
    %573 = vdwg.mxu0
    %574 = vmatpush.bf16.msra.mxu0 %v469
    %575 = vmatpush.bf16.msra.mxu0 %v467
    %576 = vmatpush.bf16.msra.mxu0 %v465
    %577 = vmatpush.bf16.msra.mxu0 %v463
    %578 = vmatpush.bf16.msra.mxu0 %v461
    %579 = vmatpush.bf16.msra.mxu0 %v459
    %580 = vmatpush.bf16.msra.mxu0 %v457
    %581 = vmatpush.bf16.msra.mxu0 %v455
    %582 = vmatmul.bf16.gmra.mxu0 %v144
    %v583 = vpop.f32.mrf.mxu0
    %v584 = vadd.f32 %v571, %v583
    %v585 = vpop.f32.mrf.mxu0
    %586 = vdwg.mxu0
    %587 = vmatpush.bf16.msra.mxu0 %v422
    %588 = vmatpush.bf16.msra.mxu0 %v420
    %589 = vmatpush.bf16.msra.mxu0 %v418
    %590 = vmatpush.bf16.msra.mxu0 %v416
    %591 = vmatpush.bf16.msra.mxu0 %v414
    %592 = vmatpush.bf16.msra.mxu0 %v412
    %593 = vmatpush.bf16.msra.mxu0 %v410
    %594 = vmatpush.bf16.msra.mxu0 %v408
    %595 = vmatmul.bf16.gmra.mxu0 %v141
    %v596 = vpop.f32.mrf.mxu0
    %v597 = vadd.f32 %v212, %v596
    %v598 = vpop.f32.mrf.mxu0
    %599 = vdwg.mxu0
    %600 = vmatpush.bf16.msra.mxu0 %v438
    %601 = vmatpush.bf16.msra.mxu0 %v436
    %602 = vmatpush.bf16.msra.mxu0 %v434
    %603 = vmatpush.bf16.msra.mxu0 %v432
    %604 = vmatpush.bf16.msra.mxu0 %v430
    %605 = vmatpush.bf16.msra.mxu0 %v428
    %606 = vmatpush.bf16.msra.mxu0 %v426
    %607 = vmatpush.bf16.msra.mxu0 %v424
    %608 = vmatmul.bf16.gmra.mxu0 %v142
    %v609 = vpop.f32.mrf.mxu0
    %v610 = vadd.f32 %v597, %v609
    %v611 = vpop.f32.mrf.mxu0
    %612 = vdwg.mxu0
    %613 = vmatpush.bf16.msra.mxu0 %v454
    %614 = vmatpush.bf16.msra.mxu0 %v452
    %615 = vmatpush.bf16.msra.mxu0 %v450
    %616 = vmatpush.bf16.msra.mxu0 %v448
    %617 = vmatpush.bf16.msra.mxu0 %v446
    %618 = vmatpush.bf16.msra.mxu0 %v444
    %619 = vmatpush.bf16.msra.mxu0 %v442
    %620 = vmatpush.bf16.msra.mxu0 %v440
    %621 = vmatmul.bf16.gmra.mxu0 %v143
    %v622 = vpop.f32.mrf.mxu0
    %v623 = vadd.f32 %v610, %v622
    %v624 = vpop.f32.mrf.mxu0
    %625 = vdwg.mxu0
    %626 = vmatpush.bf16.msra.mxu0 %v470
    %627 = vmatpush.bf16.msra.mxu0 %v468
    %628 = vmatpush.bf16.msra.mxu0 %v466
    %629 = vmatpush.bf16.msra.mxu0 %v464
    %630 = vmatpush.bf16.msra.mxu0 %v462
    %631 = vmatpush.bf16.msra.mxu0 %v460
    %632 = vmatpush.bf16.msra.mxu0 %v458
    %633 = vmatpush.bf16.msra.mxu0 %v456
    %634 = vmatmul.bf16.gmra.mxu0 %v144
    %v635 = vpop.f32.mrf.mxu0
    %v636 = vadd.f32 %v623, %v635
    %v637 = vpop.f32.mrf.mxu0
    %638 = vdwg.mxu0
    %v639 = vmax.f32 %v584, 0.0
    %v640 = vmax.f32 %v636, 0.0
    %v641 = vpack.c.bf16 %v639, %v639
    %v642 = vpack.c.bf16 %v640, %v640
    %v643 = vld [vmem:[#allocation10] sm:$0xff]
    %v644 = vld [vmem:[#allocation10 + $0x8] sm:$0xff]
    %v645 = vld [vmem:[#allocation10 + $0x10] sm:$0xff]
    %v646 = vld [vmem:[#allocation10 + $0x18] sm:$0xff]
    %v647 = vld [vmem:[#allocation10 + $0x20] sm:$0xff]
    %v648 = vld [vmem:[#allocation10 + $0x28] sm:$0xff]
    %v649 = vld [vmem:[#allocation10 + $0x30] sm:$0xff]
    %v650 = vld [vmem:[#allocation10 + $0x38] sm:$0xff]
    %v651 = vld [vmem:[#allocation10 + $0x40] sm:$0xff]
    %v652 = vld [vmem:[#allocation10 + $0x48] sm:$0xff]
    %v653 = vld [vmem:[#allocation10 + $0x50] sm:$0xff]
    %v654 = vld [vmem:[#allocation10 + $0x58] sm:$0xff]
    %v655 = vld [vmem:[#allocation10 + $0x60] sm:$0xff]
    %v656 = vld [vmem:[#allocation10 + $0x68] sm:$0xff]
    %v657 = vld [vmem:[#allocation10 + $0x70] sm:$0xff]
    %v658 = vld [vmem:[#allocation10 + $0x78] sm:$0xff]
    %v659 = vld [vmem:[#allocation10 + $0x80] sm:$0xff]
    %v660 = vld [vmem:[#allocation10 + $0x88] sm:$0xff]
    %v661 = vld [vmem:[#allocation10 + $0x90] sm:$0xff]
    %v662 = vld [vmem:[#allocation10 + $0x98] sm:$0xff]
    %v663 = vld [vmem:[#allocation10 + $0xa0] sm:$0xff]
    %v664 = vld [vmem:[#allocation10 + $0xa8] sm:$0xff]
    %v665 = vld [vmem:[#allocation10 + $0xb0] sm:$0xff]
    %v666 = vld [vmem:[#allocation10 + $0xb8] sm:$0xff]
    %v667 = vld [vmem:[#allocation10 + $0xc0] sm:$0xff]
    %v668 = vld [vmem:[#allocation10 + $0xc8] sm:$0xff]
    %v669 = vld [vmem:[#allocation10 + $0xd0] sm:$0xff]
    %v670 = vld [vmem:[#allocation10 + $0xd8] sm:$0xff]
    %v671 = vld [vmem:[#allocation10 + $0xe0] sm:$0xff]
    %v672 = vld [vmem:[#allocation10 + $0xe8] sm:$0xff]
    %v673 = vld [vmem:[#allocation10 + $0xf0] sm:$0xff]
    %v674 = vld [vmem:[#allocation10 + $0xf8] sm:$0xff]
    %v675 = vld [vmem:[#allocation11] sm:$0x3]
    %v677 = vperm.slane %v675, 0
    %v678 = vperm.slane %v675, 1
    %v713 = vunpack.c.l.b16 %v643
    %v714 = vunpack.c.h.b16 %v643
    %v715 = vunpack.c.l.b16 %v644
    %v716 = vunpack.c.h.b16 %v644
    %v717 = vunpack.c.l.b16 %v645
    %v718 = vunpack.c.h.b16 %v645
    %v719 = vunpack.c.l.b16 %v646
    %v720 = vunpack.c.h.b16 %v646
    %v721 = vunpack.c.l.b16 %v647
    %v722 = vunpack.c.h.b16 %v647
    %v723 = vunpack.c.l.b16 %v648
    %v724 = vunpack.c.h.b16 %v648
    %v725 = vunpack.c.l.b16 %v649
    %v726 = vunpack.c.h.b16 %v649
    %v727 = vunpack.c.l.b16 %v650
    %v728 = vunpack.c.h.b16 %v650
    %v729 = vunpack.c.l.b16 %v651
    %v730 = vunpack.c.h.b16 %v651
    %v731 = vunpack.c.l.b16 %v652
    %v732 = vunpack.c.h.b16 %v652
    %v733 = vunpack.c.l.b16 %v653
    %v734 = vunpack.c.h.b16 %v653
    %v735 = vunpack.c.l.b16 %v654
    %v736 = vunpack.c.h.b16 %v654
    %v737 = vunpack.c.l.b16 %v655
    %v738 = vunpack.c.h.b16 %v655
    %v739 = vunpack.c.l.b16 %v656
    %v740 = vunpack.c.h.b16 %v656
    %v741 = vunpack.c.l.b16 %v657
    %v742 = vunpack.c.h.b16 %v657
    %v743 = vunpack.c.l.b16 %v658
    %v744 = vunpack.c.h.b16 %v658
    %v745 = vunpack.c.l.b16 %v659
    %v746 = vunpack.c.h.b16 %v659
    %v747 = vunpack.c.l.b16 %v660
    %v748 = vunpack.c.h.b16 %v660
    %v749 = vunpack.c.l.b16 %v661
    %v750 = vunpack.c.h.b16 %v661
    %v751 = vunpack.c.l.b16 %v662
    %v752 = vunpack.c.h.b16 %v662
    %v753 = vunpack.c.l.b16 %v663
    %v754 = vunpack.c.h.b16 %v663
    %v755 = vunpack.c.l.b16 %v664
    %v756 = vunpack.c.h.b16 %v664
    %v757 = vunpack.c.l.b16 %v665
    %v758 = vunpack.c.h.b16 %v665
    %v759 = vunpack.c.l.b16 %v666
    %v760 = vunpack.c.h.b16 %v666
    %v761 = vunpack.c.l.b16 %v667
    %v762 = vunpack.c.h.b16 %v667
    %v763 = vunpack.c.l.b16 %v668
    %v764 = vunpack.c.h.b16 %v668
    %v765 = vunpack.c.l.b16 %v669
    %v766 = vunpack.c.h.b16 %v669
    %v767 = vunpack.c.l.b16 %v670
    %v768 = vunpack.c.h.b16 %v670
    %v769 = vunpack.c.l.b16 %v671
    %v770 = vunpack.c.h.b16 %v671
    %v771 = vunpack.c.l.b16 %v672
    %v772 = vunpack.c.h.b16 %v672
    %v773 = vunpack.c.l.b16 %v673
    %v774 = vunpack.c.h.b16 %v673
    %v775 = vunpack.c.l.b16 %v674
    %v776 = vunpack.c.h.b16 %v674
    %v777 = vpack.c.b16 %v715, %v713
    %v778 = vpack.c.b16 %v716, %v714
    %v779 = vpack.c.b16 %v719, %v717
    %v780 = vpack.c.b16 %v720, %v718
    %v781 = vpack.c.b16 %v723, %v721
    %v782 = vpack.c.b16 %v724, %v722
    %v783 = vpack.c.b16 %v727, %v725
    %v784 = vpack.c.b16 %v728, %v726
    %v785 = vpack.c.b16 %v731, %v729
    %v786 = vpack.c.b16 %v732, %v730
    %v787 = vpack.c.b16 %v735, %v733
    %v788 = vpack.c.b16 %v736, %v734
    %v789 = vpack.c.b16 %v739, %v737
    %v790 = vpack.c.b16 %v740, %v738
    %v791 = vpack.c.b16 %v743, %v741
    %v792 = vpack.c.b16 %v744, %v742
    %v793 = vpack.c.b16 %v747, %v745
    %v794 = vpack.c.b16 %v748, %v746
    %v795 = vpack.c.b16 %v751, %v749
    %v796 = vpack.c.b16 %v752, %v750
    %v797 = vpack.c.b16 %v755, %v753
    %v798 = vpack.c.b16 %v756, %v754
    %v799 = vpack.c.b16 %v759, %v757
    %v800 = vpack.c.b16 %v760, %v758
    %v801 = vpack.c.b16 %v763, %v761
    %v802 = vpack.c.b16 %v764, %v762
    %v803 = vpack.c.b16 %v767, %v765
    %v804 = vpack.c.b16 %v768, %v766
    %v805 = vpack.c.b16 %v771, %v769
    %v806 = vpack.c.b16 %v772, %v770
    %v807 = vpack.c.b16 %v775, %v773
    %v808 = vpack.c.b16 %v776, %v774
    %841 = vmatpush.bf16.msra.mxu0 %v791
    %842 = vmatpush.bf16.msra.mxu0 %v789
    %843 = vmatpush.bf16.msra.mxu0 %v787
    %844 = vmatpush.bf16.msra.mxu0 %v785
    %845 = vmatpush.bf16.msra.mxu0 %v783
    %846 = vmatpush.bf16.msra.mxu0 %v781
    %847 = vmatpush.bf16.msra.mxu0 %v779
    %848 = vmatpush.bf16.msra.mxu0 %v777
    %849 = vmatmul.bf16.gmra.mxu0 %v641
    %v850 = vpop.f32.mrf.mxu0
    %v851 = vadd.f32 %v677, %v850
    %v852 = vpop.f32.mrf.mxu0
    %853 = vdwg.mxu0
    %854 = vmatpush.bf16.msra.mxu0 %v807
    %855 = vmatpush.bf16.msra.mxu0 %v805
    %856 = vmatpush.bf16.msra.mxu0 %v803
    %857 = vmatpush.bf16.msra.mxu0 %v801
    %858 = vmatpush.bf16.msra.mxu0 %v799
    %859 = vmatpush.bf16.msra.mxu0 %v797
    %860 = vmatpush.bf16.msra.mxu0 %v795
    %861 = vmatpush.bf16.msra.mxu0 %v793
    %862 = vmatmul.bf16.gmra.mxu0 %v642
    %v863 = vpop.f32.mrf.mxu0
    %v864 = vadd.f32 %v851, %v863
    %v865 = vpop.f32.mrf.mxu0
    %866 = vdwg.mxu0
    %867 = vmatpush.bf16.msra.mxu0 %v792
    %868 = vmatpush.bf16.msra.mxu0 %v790
    %869 = vmatpush.bf16.msra.mxu0 %v788
    %870 = vmatpush.bf16.msra.mxu0 %v786
    %871 = vmatpush.bf16.msra.mxu0 %v784
    %872 = vmatpush.bf16.msra.mxu0 %v782
    %873 = vmatpush.bf16.msra.mxu0 %v780
    %874 = vmatpush.bf16.msra.mxu0 %v778
    %875 = vmatmul.bf16.gmra.mxu0 %v641
    %v876 = vpop.f32.mrf.mxu0
    %v877 = vadd.f32 %v678, %v876
    %v878 = vpop.f32.mrf.mxu0
    %879 = vdwg.mxu0
    %880 = vmatpush.bf16.msra.mxu0 %v808
    %881 = vmatpush.bf16.msra.mxu0 %v806
    %882 = vmatpush.bf16.msra.mxu0 %v804
    %883 = vmatpush.bf16.msra.mxu0 %v802
    %884 = vmatpush.bf16.msra.mxu0 %v800
    %885 = vmatpush.bf16.msra.mxu0 %v798
    %886 = vmatpush.bf16.msra.mxu0 %v796
    %887 = vmatpush.bf16.msra.mxu0 %v794
    %888 = vmatmul.bf16.gmra.mxu0 %v642
    %v889 = vpop.f32.mrf.mxu0
    %v890 = vadd.f32 %v877, %v889
    %v891 = vpop.f32.mrf.mxu0
    %892 = vdwg.mxu0
    %v893 = vmax.f32 %v864, 0.0
    %v894 = vmax.f32 %v890, 0.0
    %v895 = vpack.c.bf16 %v893, %v893
    %v896 = vpack.c.bf16 %v894, %v894
    %v897 = vld [vmem:[#allocation13] sm:$0xff]
    %v898 = vld [vmem:[#allocation13 + $0x8] sm:$0xff]
    %v899 = vld [vmem:[#allocation13 + $0x10] sm:$0xff]
    %v900 = vld [vmem:[#allocation13 + $0x18] sm:$0xff]
    %v901 = vld [vmem:[#allocation13 + $0x20] sm:$0xff]
    %v902 = vld [vmem:[#allocation13 + $0x28] sm:$0xff]
    %v903 = vld [vmem:[#allocation13 + $0x30] sm:$0xff]
    %v904 = vld [vmem:[#allocation13 + $0x38] sm:$0xff]
    %v905 = vld [vmem:[#allocation13 + $0x40] sm:$0xff]
    %v906 = vld [vmem:[#allocation13 + $0x48] sm:$0xff]
    %v907 = vld [vmem:[#allocation13 + $0x50] sm:$0xff]
    %v908 = vld [vmem:[#allocation13 + $0x58] sm:$0xff]
    %v909 = vld [vmem:[#allocation13 + $0x60] sm:$0xff]
    %v910 = vld [vmem:[#allocation13 + $0x68] sm:$0xff]
    %v911 = vld [vmem:[#allocation13 + $0x70] sm:$0xff]
    %v912 = vld [vmem:[#allocation13 + $0x78] sm:$0xff]
    %v913 = vld [vmem:[#allocation13 + $0x80] sm:$0xff]
    %v914 = vld [vmem:[#allocation13 + $0x88] sm:$0xff]
    %v915 = vld [vmem:[#allocation13 + $0x90] sm:$0xff]
    %v916 = vld [vmem:[#allocation13 + $0x98] sm:$0xff]
    %v917 = vld [vmem:[#allocation13 + $0xa0] sm:$0xff]
    %v918 = vld [vmem:[#allocation13 + $0xa8] sm:$0xff]
    %v919 = vld [vmem:[#allocation13 + $0xb0] sm:$0xff]
    %v920 = vld [vmem:[#allocation13 + $0xb8] sm:$0xff]
    %v921 = vld [vmem:[#allocation13 + $0xc0] sm:$0xff]
    %v922 = vld [vmem:[#allocation13 + $0xc8] sm:$0xff]
    %v923 = vld [vmem:[#allocation13 + $0xd0] sm:$0xff]
    %v924 = vld [vmem:[#allocation13 + $0xd8] sm:$0xff]
    %v925 = vld [vmem:[#allocation13 + $0xe0] sm:$0xff]
    %v926 = vld [vmem:[#allocation13 + $0xe8] sm:$0xff]
    %v927 = vld [vmem:[#allocation13 + $0xf0] sm:$0xff]
    %v928 = vld [vmem:[#allocation13 + $0xf8] sm:$0xff]
    %v929 = vld [vmem:[#allocation13 + $0x100] sm:$0xff]
    %v930 = vld [vmem:[#allocation13 + $0x108] sm:$0xff]
    %v931 = vld [vmem:[#allocation13 + $0x110] sm:$0xff]
    %v932 = vld [vmem:[#allocation13 + $0x118] sm:$0xff]
    %v933 = vld [vmem:[#allocation13 + $0x120] sm:$0xff]
    %v934 = vld [vmem:[#allocation13 + $0x128] sm:$0xff]
    %v935 = vld [vmem:[#allocation13 + $0x130] sm:$0xff]
    %v936 = vld [vmem:[#allocation13 + $0x138] sm:$0xff]
    %v937 = vld [vmem:[#allocation13 + $0x140] sm:$0xff]
    %v938 = vld [vmem:[#allocation13 + $0x148] sm:$0xff]
    %v939 = vld [vmem:[#allocation13 + $0x150] sm:$0xff]
    %v940 = vld [vmem:[#allocation13 + $0x158] sm:$0xff]
    %v941 = vld [vmem:[#allocation13 + $0x160] sm:$0xff]
    %v942 = vld [vmem:[#allocation13 + $0x168] sm:$0xff]
    %v943 = vld [vmem:[#allocation13 + $0x170] sm:$0xff]
    %v944 = vld [vmem:[#allocation13 + $0x178] sm:$0xff]
    %v945 = vld [vmem:[#allocation13 + $0x180] sm:$0xff]
    %v946 = vld [vmem:[#allocation13 + $0x188] sm:$0xff]
    %v947 = vld [vmem:[#allocation13 + $0x190] sm:$0xff]
    %v948 = vld [vmem:[#allocation13 + $0x198] sm:$0xff]
    %v949 = vld [vmem:[#allocation13 + $0x1a0] sm:$0xff]
    %v950 = vld [vmem:[#allocation13 + $0x1a8] sm:$0xff]
    %v951 = vld [vmem:[#allocation13 + $0x1b0] sm:$0xff]
    %v952 = vld [vmem:[#allocation13 + $0x1b8] sm:$0xff]
    %v953 = vld [vmem:[#allocation13 + $0x1c0] sm:$0xff]
    %v954 = vld [vmem:[#allocation13 + $0x1c8] sm:$0xff]
    %v955 = vld [vmem:[#allocation13 + $0x1d0] sm:$0xff]
    %v956 = vld [vmem:[#allocation13 + $0x1d8] sm:$0xff]
    %v957 = vld [vmem:[#allocation13 + $0x1e0] sm:$0xff]
    %v958 = vld [vmem:[#allocation13 + $0x1e8] sm:$0xff]
    %v959 = vld [vmem:[#allocation13 + $0x1f0] sm:$0xff]
    %v960 = vld [vmem:[#allocation13 + $0x1f8] sm:$0xff]
    %v961 = vld [vmem:[%s8] sm:$0xf]
    %v963 = vperm.slane %v961, 0
    %v964 = vperm.slane %v961, 1
    %v965 = vperm.slane %v961, 2
    %v966 = vperm.slane %v961, 3
    %v1035 = vunpack.c.l.b16 %v897
    %v1036 = vunpack.c.h.b16 %v897
    %v1037 = vunpack.c.l.b16 %v898
    %v1038 = vunpack.c.h.b16 %v898
    %v1039 = vunpack.c.l.b16 %v899
    %v1040 = vunpack.c.h.b16 %v899
    %v1041 = vunpack.c.l.b16 %v900
    %v1042 = vunpack.c.h.b16 %v900
    %v1043 = vunpack.c.l.b16 %v901
    %v1044 = vunpack.c.h.b16 %v901
    %v1045 = vunpack.c.l.b16 %v902
    %v1046 = vunpack.c.h.b16 %v902
    %v1047 = vunpack.c.l.b16 %v903
    %v1048 = vunpack.c.h.b16 %v903
    %v1049 = vunpack.c.l.b16 %v904
    %v1050 = vunpack.c.h.b16 %v904
    %v1051 = vunpack.c.l.b16 %v905
    %v1052 = vunpack.c.h.b16 %v905
    %v1053 = vunpack.c.l.b16 %v906
    %v1054 = vunpack.c.h.b16 %v906
    %v1055 = vunpack.c.l.b16 %v907
    %v1056 = vunpack.c.h.b16 %v907
    %v1057 = vunpack.c.l.b16 %v908
    %v1058 = vunpack.c.h.b16 %v908
    %v1059 = vunpack.c.l.b16 %v909
    %v1060 = vunpack.c.h.b16 %v909
    %v1061 = vunpack.c.l.b16 %v910
    %v1062 = vunpack.c.h.b16 %v910
    %v1063 = vunpack.c.l.b16 %v911
    %v1064 = vunpack.c.h.b16 %v911
    %v1065 = vunpack.c.l.b16 %v912
    %v1066 = vunpack.c.h.b16 %v912
    %v1067 = vunpack.c.l.b16 %v913
    %v1068 = vunpack.c.h.b16 %v913
    %v1069 = vunpack.c.l.b16 %v914
    %v1070 = vunpack.c.h.b16 %v914
    %v1071 = vunpack.c.l.b16 %v915
    %v1072 = vunpack.c.h.b16 %v915
    %v1073 = vunpack.c.l.b16 %v916
    %v1074 = vunpack.c.h.b16 %v916
    %v1075 = vunpack.c.l.b16 %v917
    %v1076 = vunpack.c.h.b16 %v917
    %v1077 = vunpack.c.l.b16 %v918
    %v1078 = vunpack.c.h.b16 %v918
    %v1079 = vunpack.c.l.b16 %v919
    %v1080 = vunpack.c.h.b16 %v919
    %v1081 = vunpack.c.l.b16 %v920
    %v1082 = vunpack.c.h.b16 %v920
    %v1083 = vunpack.c.l.b16 %v921
    %v1084 = vunpack.c.h.b16 %v921
    %v1085 = vunpack.c.l.b16 %v922
    %v1086 = vunpack.c.h.b16 %v922
    %v1087 = vunpack.c.l.b16 %v923
    %v1088 = vunpack.c.h.b16 %v923
    %v1089 = vunpack.c.l.b16 %v924
    %v1090 = vunpack.c.h.b16 %v924
    %v1091 = vunpack.c.l.b16 %v925
    %v1092 = vunpack.c.h.b16 %v925
    %v1093 = vunpack.c.l.b16 %v926
    %v1094 = vunpack.c.h.b16 %v926
    %v1095 = vunpack.c.l.b16 %v927
    %v1096 = vunpack.c.h.b16 %v927
    %v1097 = vunpack.c.l.b16 %v928
    %v1098 = vunpack.c.h.b16 %v928
    %v1099 = vunpack.c.l.b16 %v929
    %v1100 = vunpack.c.h.b16 %v929
    %v1101 = vunpack.c.l.b16 %v930
    %v1102 = vunpack.c.h.b16 %v930
    %v1103 = vunpack.c.l.b16 %v931
    %v1104 = vunpack.c.h.b16 %v931
    %v1105 = vunpack.c.l.b16 %v932
    %v1106 = vunpack.c.h.b16 %v932
    %v1107 = vunpack.c.l.b16 %v933
    %v1108 = vunpack.c.h.b16 %v933
    %v1109 = vunpack.c.l.b16 %v934
    %v1110 = vunpack.c.h.b16 %v934
    %v1111 = vunpack.c.l.b16 %v935
    %v1112 = vunpack.c.h.b16 %v935
    %v1113 = vunpack.c.l.b16 %v936
    %v1114 = vunpack.c.h.b16 %v936
    %v1115 = vunpack.c.l.b16 %v937
    %v1116 = vunpack.c.h.b16 %v937
    %v1117 = vunpack.c.l.b16 %v938
    %v1118 = vunpack.c.h.b16 %v938
    %v1119 = vunpack.c.l.b16 %v939
    %v1120 = vunpack.c.h.b16 %v939
    %v1121 = vunpack.c.l.b16 %v940
    %v1122 = vunpack.c.h.b16 %v940
    %v1123 = vunpack.c.l.b16 %v941
    %v1124 = vunpack.c.h.b16 %v941
    %v1125 = vunpack.c.l.b16 %v942
    %v1126 = vunpack.c.h.b16 %v942
    %v1127 = vunpack.c.l.b16 %v943
    %v1128 = vunpack.c.h.b16 %v943
    %v1129 = vunpack.c.l.b16 %v944
    %v1130 = vunpack.c.h.b16 %v944
    %v1131 = vunpack.c.l.b16 %v945
    %v1132 = vunpack.c.h.b16 %v945
    %v1133 = vunpack.c.l.b16 %v946
    %v1134 = vunpack.c.h.b16 %v946
    %v1135 = vunpack.c.l.b16 %v947
    %v1136 = vunpack.c.h.b16 %v947
    %v1137 = vunpack.c.l.b16 %v948
    %v1138 = vunpack.c.h.b16 %v948
    %v1139 = vunpack.c.l.b16 %v949
    %v1140 = vunpack.c.h.b16 %v949
    %v1141 = vunpack.c.l.b16 %v950
    %v1142 = vunpack.c.h.b16 %v950
    %v1143 = vunpack.c.l.b16 %v951
    %v1144 = vunpack.c.h.b16 %v951
    %v1145 = vunpack.c.l.b16 %v952
    %v1146 = vunpack.c.h.b16 %v952
    %v1147 = vunpack.c.l.b16 %v953
    %v1148 = vunpack.c.h.b16 %v953
    %v1149 = vunpack.c.l.b16 %v954
    %v1150 = vunpack.c.h.b16 %v954
    %v1151 = vunpack.c.l.b16 %v955
    %v1152 = vunpack.c.h.b16 %v955
    %v1153 = vunpack.c.l.b16 %v956
    %v1154 = vunpack.c.h.b16 %v956
    %v1155 = vunpack.c.l.b16 %v957
    %v1156 = vunpack.c.h.b16 %v957
    %v1157 = vunpack.c.l.b16 %v958
    %v1158 = vunpack.c.h.b16 %v958
    %v1159 = vunpack.c.l.b16 %v959
    %v1160 = vunpack.c.h.b16 %v959
    %v1161 = vunpack.c.l.b16 %v960
    %v1162 = vunpack.c.h.b16 %v960
    %v1163 = vpack.c.b16 %v1039, %v1035
    %v1164 = vpack.c.b16 %v1040, %v1036
    %v1165 = vpack.c.b16 %v1041, %v1037
    %v1166 = vpack.c.b16 %v1042, %v1038
    %v1167 = vpack.c.b16 %v1047, %v1043
    %v1168 = vpack.c.b16 %v1048, %v1044
    %v1169 = vpack.c.b16 %v1049, %v1045
    %v1170 = vpack.c.b16 %v1050, %v1046
    %v1171 = vpack.c.b16 %v1055, %v1051
    %v1172 = vpack.c.b16 %v1056, %v1052
    %v1173 = vpack.c.b16 %v1057, %v1053
    %v1174 = vpack.c.b16 %v1058, %v1054
    %v1175 = vpack.c.b16 %v1063, %v1059
    %v1176 = vpack.c.b16 %v1064, %v1060
    %v1177 = vpack.c.b16 %v1065, %v1061
    %v1178 = vpack.c.b16 %v1066, %v1062
    %v1179 = vpack.c.b16 %v1071, %v1067
    %v1180 = vpack.c.b16 %v1072, %v1068
    %v1181 = vpack.c.b16 %v1073, %v1069
    %v1182 = vpack.c.b16 %v1074, %v1070
    %v1183 = vpack.c.b16 %v1079, %v1075
    %v1184 = vpack.c.b16 %v1080, %v1076
    %v1185 = vpack.c.b16 %v1081, %v1077
    %v1186 = vpack.c.b16 %v1082, %v1078
    %v1187 = vpack.c.b16 %v1087, %v1083
    %v1188 = vpack.c.b16 %v1088, %v1084
    %v1189 = vpack.c.b16 %v1089, %v1085
    %v1190 = vpack.c.b16 %v1090, %v1086
    %v1191 = vpack.c.b16 %v1095, %v1091
    %v1192 = vpack.c.b16 %v1096, %v1092
    %v1193 = vpack.c.b16 %v1097, %v1093
    %v1194 = vpack.c.b16 %v1098, %v1094
    %v1195 = vpack.c.b16 %v1103, %v1099
    %v1196 = vpack.c.b16 %v1104, %v1100
    %v1197 = vpack.c.b16 %v1105, %v1101
    %v1198 = vpack.c.b16 %v1106, %v1102
    %v1199 = vpack.c.b16 %v1111, %v1107
    %v1200 = vpack.c.b16 %v1112, %v1108
    %v1201 = vpack.c.b16 %v1113, %v1109
    %v1202 = vpack.c.b16 %v1114, %v1110
    %v1203 = vpack.c.b16 %v1119, %v1115
    %v1204 = vpack.c.b16 %v1120, %v1116
    %v1205 = vpack.c.b16 %v1121, %v1117
    %v1206 = vpack.c.b16 %v1122, %v1118
    %v1207 = vpack.c.b16 %v1127, %v1123
    %v1208 = vpack.c.b16 %v1128, %v1124
    %v1209 = vpack.c.b16 %v1129, %v1125
    %v1210 = vpack.c.b16 %v1130, %v1126
    %v1211 = vpack.c.b16 %v1135, %v1131
    %v1212 = vpack.c.b16 %v1136, %v1132
    %v1213 = vpack.c.b16 %v1137, %v1133
    %v1214 = vpack.c.b16 %v1138, %v1134
    %v1215 = vpack.c.b16 %v1143, %v1139
    %v1216 = vpack.c.b16 %v1144, %v1140
    %v1217 = vpack.c.b16 %v1145, %v1141
    %v1218 = vpack.c.b16 %v1146, %v1142
    %v1219 = vpack.c.b16 %v1151, %v1147
    %v1220 = vpack.c.b16 %v1152, %v1148
    %v1221 = vpack.c.b16 %v1153, %v1149
    %v1222 = vpack.c.b16 %v1154, %v1150
    %v1223 = vpack.c.b16 %v1159, %v1155
    %v1224 = vpack.c.b16 %v1160, %v1156
    %v1225 = vpack.c.b16 %v1161, %v1157
    %v1226 = vpack.c.b16 %v1162, %v1158
    %1291 = vmatpush.bf16.msra.mxu0 %v1191
    %1292 = vmatpush.bf16.msra.mxu0 %v1187
    %1293 = vmatpush.bf16.msra.mxu0 %v1183
    %1294 = vmatpush.bf16.msra.mxu0 %v1179
    %1295 = vmatpush.bf16.msra.mxu0 %v1175
    %1296 = vmatpush.bf16.msra.mxu0 %v1171
    %1297 = vmatpush.bf16.msra.mxu0 %v1167
    %1298 = vmatpush.bf16.msra.mxu0 %v1163
    %1299 = vmatmul.bf16.gmra.mxu0 %v895
    %v1300 = vpop.f32.mrf.mxu0
    %v1301 = vadd.f32 %v963, %v1300
    %v1302 = vpop.f32.mrf.mxu0
    %1303 = vdwg.mxu0
    %1304 = vmatpush.bf16.msra.mxu0 %v1223
    %1305 = vmatpush.bf16.msra.mxu0 %v1219
    %1306 = vmatpush.bf16.msra.mxu0 %v1215
    %1307 = vmatpush.bf16.msra.mxu0 %v1211
    %1308 = vmatpush.bf16.msra.mxu0 %v1207
    %1309 = vmatpush.bf16.msra.mxu0 %v1203
    %1310 = vmatpush.bf16.msra.mxu0 %v1199
    %1311 = vmatpush.bf16.msra.mxu0 %v1195
    %1312 = vmatmul.bf16.gmra.mxu0 %v896
    %v1313 = vpop.f32.mrf.mxu0
    %v1314 = vadd.f32 %v1301, %v1313
    %v1315 = vpop.f32.mrf.mxu0
    %1316 = vdwg.mxu0
    %1317 = vmatpush.bf16.msra.mxu0 %v1192
    %1318 = vmatpush.bf16.msra.mxu0 %v1188
    %1319 = vmatpush.bf16.msra.mxu0 %v1184
    %1320 = vmatpush.bf16.msra.mxu0 %v1180
    %1321 = vmatpush.bf16.msra.mxu0 %v1176
    %1322 = vmatpush.bf16.msra.mxu0 %v1172
    %1323 = vmatpush.bf16.msra.mxu0 %v1168
    %1324 = vmatpush.bf16.msra.mxu0 %v1164
    %1325 = vmatmul.bf16.gmra.mxu0 %v895
    %v1326 = vpop.f32.mrf.mxu0
    %v1327 = vadd.f32 %v964, %v1326
    %v1328 = vpop.f32.mrf.mxu0
    %1329 = vdwg.mxu0
    %1330 = vmatpush.bf16.msra.mxu0 %v1224
    %1331 = vmatpush.bf16.msra.mxu0 %v1220
    %1332 = vmatpush.bf16.msra.mxu0 %v1216
    %1333 = vmatpush.bf16.msra.mxu0 %v1212
    %1334 = vmatpush.bf16.msra.mxu0 %v1208
    %1335 = vmatpush.bf16.msra.mxu0 %v1204
    %1336 = vmatpush.bf16.msra.mxu0 %v1200
    %1337 = vmatpush.bf16.msra.mxu0 %v1196
    %1338 = vmatmul.bf16.gmra.mxu0 %v896
    %v1339 = vpop.f32.mrf.mxu0
    %v1340 = vadd.f32 %v1327, %v1339
    %v1341 = vpop.f32.mrf.mxu0
    %1342 = vdwg.mxu0
    %1343 = vmatpush.bf16.msra.mxu0 %v1193
    %1344 = vmatpush.bf16.msra.mxu0 %v1189
    %1345 = vmatpush.bf16.msra.mxu0 %v1185
    %1346 = vmatpush.bf16.msra.mxu0 %v1181
    %1347 = vmatpush.bf16.msra.mxu0 %v1177
    %1348 = vmatpush.bf16.msra.mxu0 %v1173
    %1349 = vmatpush.bf16.msra.mxu0 %v1169
    %1350 = vmatpush.bf16.msra.mxu0 %v1165
    %1351 = vmatmul.bf16.gmra.mxu0 %v895
    %v1352 = vpop.f32.mrf.mxu0
    %v1353 = vadd.f32 %v965, %v1352
    %v1354 = vpop.f32.mrf.mxu0
    %1355 = vdwg.mxu0
    %1356 = vmatpush.bf16.msra.mxu0 %v1225
    %1357 = vmatpush.bf16.msra.mxu0 %v1221
    %1358 = vmatpush.bf16.msra.mxu0 %v1217
    %1359 = vmatpush.bf16.msra.mxu0 %v1213
    %1360 = vmatpush.bf16.msra.mxu0 %v1209
    %1361 = vmatpush.bf16.msra.mxu0 %v1205
    %1362 = vmatpush.bf16.msra.mxu0 %v1201
    %1363 = vmatpush.bf16.msra.mxu0 %v1197
    %1364 = vmatmul.bf16.gmra.mxu0 %v896
    %v1365 = vpop.f32.mrf.mxu0
    %v1366 = vadd.f32 %v1353, %v1365
    %v1367 = vpop.f32.mrf.mxu0
    %1368 = vdwg.mxu0
    %1369 = vmatpush.bf16.msra.mxu0 %v1194
    %1370 = vmatpush.bf16.msra.mxu0 %v1190
    %1371 = vmatpush.bf16.msra.mxu0 %v1186
    %1372 = vmatpush.bf16.msra.mxu0 %v1182
    %1373 = vmatpush.bf16.msra.mxu0 %v1178
    %1374 = vmatpush.bf16.msra.mxu0 %v1174
    %1375 = vmatpush.bf16.msra.mxu0 %v1170
    %1376 = vmatpush.bf16.msra.mxu0 %v1166
    %1377 = vmatmul.bf16.gmra.mxu0 %v895
    %v1378 = vpop.f32.mrf.mxu0
    %v1379 = vadd.f32 %v966, %v1378
    %v1380 = vpop.f32.mrf.mxu0
    %1381 = vdwg.mxu0
    %1382 = vmatpush.bf16.msra.mxu0 %v1226
    %1383 = vmatpush.bf16.msra.mxu0 %v1222
    %1384 = vmatpush.bf16.msra.mxu0 %v1218
    %1385 = vmatpush.bf16.msra.mxu0 %v1214
    %1386 = vmatpush.bf16.msra.mxu0 %v1210
    %1387 = vmatpush.bf16.msra.mxu0 %v1206
    %1388 = vmatpush.bf16.msra.mxu0 %v1202
    %1389 = vmatpush.bf16.msra.mxu0 %v1198
    %1390 = vmatmul.bf16.gmra.mxu0 %v896
    %v1391 = vpop.f32.mrf.mxu0
    %v1392 = vadd.f32 %v1379, %v1391
    %v1393 = vpop.f32.mrf.mxu0
    %1394 = vdwg.mxu0
    %v1395 = vld [vmem:[#allocation5] sm:$0xff]
    %v1396 = vld [vmem:[#allocation5 + $0x8] sm:$0xff]
    %v1397 = vld [vmem:[#allocation5 + $0x10] sm:$0xff]
    %v1398 = vld [vmem:[#allocation5 + $0x18] sm:$0xff]
    %v1399 = vadd.f32 %v1395, %v1314
    %v1400 = vadd.f32 %v1396, %v1340
    %v1401 = vadd.f32 %v1397, %v1366
    %v1402 = vadd.f32 %v1398, %v1392
    %1403 = vst [vmem:[#allocation14] sm:$0xff] %v1399
    %1404 = vst [vmem:[#allocation14 + $0x8] sm:$0xff] %v1400
    %1405 = vst [vmem:[#allocation14 + $0x10] sm:$0xff] %v1401
    %1406 = vst [vmem:[#allocation14 + $0x18] sm:$0xff] %v1402
    %v1407 = vld [vmem:[#allocation7] sm:$0xff]
    %v1408 = vld [vmem:[#allocation7 + $0x8] sm:$0xff]
    %v1409 = vld [vmem:[#allocation7 + $0x10] sm:$0xff]
    %v1410 = vld [vmem:[#allocation7 + $0x18] sm:$0xff]
    %v1411 = vadd.f32 %v1407, %v1314
    %v1412 = vadd.f32 %v1408, %v1340
    %v1413 = vadd.f32 %v1409, %v1366
    %v1414 = vadd.f32 %v1410, %v1392
    %1415 = vst [vmem:[#allocation15] sm:$0xff] %v1411
    %1416 = vst [vmem:[#allocation15 + $0x8] sm:$0xff] %v1412
    %1417 = vst [vmem:[#allocation15 + $0x10] sm:$0xff] %v1413
    %1418 = vst [vmem:[#allocation15 + $0x18] sm:$0xff] %v1414
    // Predicated region
    $region66: #{tpu_custom_call.1} parent=1 // pred_check
      _
    $region67: #{tpu_custom_call.1} parent=1 // pred_check_branch
      %1420 = sbr.rel (0) target = $region69
    $region68: #{tpu_custom_call.1} parent=1 // pred_region
      %1422 = vsyncadd [#allocation4], 0
      %s1424 = sshll.u32 [#allocation14], 4
      %s1425 = int_to_ptr.vmem [resolvable:$true] %s1424
      %s1426 = sshll.u32 %s9, 4
      %s1427 = int_to_ptr.hbm [resolvable:$true] %s1426
      %1429 = dma.vmem_to_hbm [thread:$0]  %s1425, 512, %s1427, [#allocation4]
    $region69: #{tpu_custom_call.1} parent=1 // pred_fallthru
      _
    // Predicated region
    $region70: #{tpu_custom_call.1} parent=1 // pred_check
      _
    $region71: #{tpu_custom_call.1} parent=1 // pred_check_branch
      %1431 = sbr.rel (0) target = $region73
    $region72: #{tpu_custom_call.1} parent=1 // pred_region
      %1433 = vsyncadd [#allocation16], 0
      %s1435 = sshll.u32 [#allocation15], 4
      %s1436 = int_to_ptr.vmem [resolvable:$true] %s1435
      %s1437 = sshll.u32 %s10, 4
      %s1438 = int_to_ptr.hbm [resolvable:$true] %s1437
      %1440 = dma.vmem_to_hbm [thread:$0]  %s1436, 512, %s1438, [#allocation16]
    $region73: #{tpu_custom_call.1} parent=1 // pred_fallthru
      _
    // Predicated region
    $region74: #{tpu_custom_call.1} parent=1 // pred_check
      _
    $region75: #{tpu_custom_call.1} parent=1 // pred_check_branch
      %1442 = sbr.rel (0) target = $region77
    $region76: #{tpu_custom_call.1} parent=1 // pred_region
      %1444 = dma.done [#allocation4], 512
    $region77: #{tpu_custom_call.1} parent=1 // pred_fallthru
      _
    // Predicated region
    $region78: #{tpu_custom_call.1} parent=1 // pred_check
      _
    $region79: #{tpu_custom_call.1} parent=1 // pred_check_branch
      %1446 = sbr.rel (0) target = $region81
    $region80: #{tpu_custom_call.1} parent=1 // pred_region
      %1448 = dma.done [#allocation16], 512
    $region81: #{tpu_custom_call.1} parent=1 // pred_fallthru
      _
    %1449 = vsyncpa [#allocation3], 1
    %1450 = vsyncpa [#allocation6], 1
    %1451 = vsyncpa [#allocation9], 1
    %1452 = vsyncpa [#allocation12], 1
    %1453 = vsyncpa [#allocation4], 1
    %1454 = vsyncpa [#allocation16], 1

</llo_original>
